<compile_context>
chip_gen: v7x
topology: tpu7x:2x2x1
jax: 0.10.0
libtpu: 0.0.40
codegen_flags: <defaults>
</compile_context>

<pallas_src>
import functools
from typing import NamedTuple

import jax
import jax.numpy as jnp
from jax import lax
from jax.experimental import pallas as pl
from jax.experimental.pallas import tpu as pltpu

_LANE = 128
_SUBLANE = 8
# Safe scoped-VMEM ceiling across generations: leaves ~25% headroom on v7x's
# 64 MiB per-TC VMEM and is well inside v5e/v6e's 128 MiB.
_VMEM_LIMIT_BYTES = 48 * 1024 * 1024


def _round_up(x, m):
    return ((x + m - 1) // m) * m


def _cdiv(a, b):
    return (a + b - 1) // b


# ---------------------------------------------------------------------------
# Kernels
# ---------------------------------------------------------------------------
def _lightgcn_kernel(a_ref, hs_ref, nd_ref, o_ref):
    """Tiled-hs variant: hs streamed per (src-tile) block.

    a_ref  : (tm, tk) bf16  raw 0/1 adjacency tile, A[v, u] = edge u -> v
    hs_ref : (tk, Dp) bf16  source features pre-scaled by 1/sqrt(out_deg(u))
    nd_ref : (tm, 1)  f32   destination scaling 1/sqrt(in_deg(v))
    o_ref  : (tm, Dp) f32   output tile, VMEM-resident across the src axis
                            (doubles as the f32 accumulator).
    """
    k = pl.program_id(1)

    @pl.when(k == 0)
    def _():
        o_ref[...] = jnp.zeros_like(o_ref)

    o_ref[...] += jnp.dot(
        a_ref[...], hs_ref[...], preferred_element_type=jnp.float32
    )

    @pl.when(k == pl.num_programs(1) - 1)
    def _():
        o_ref[...] = o_ref[...] * nd_ref[...]


def _lightgcn_kernel_resident_hs(a_ref, hs_ref, nd_ref, o_ref, *, tk):
    """Resident-hs variant: the full scaled feature matrix lives in VMEM
    (constant index_map -> DMA'd once); slice the k-th (tk, Dp) block here."""
    k = pl.program_id(1)

    @pl.when(k == 0)
    def _():
        o_ref[...] = jnp.zeros_like(o_ref)

    start = pl.multiple_of(k * tk, tk)
    hs_blk = hs_ref[pl.ds(start, tk), :]
    o_ref[...] += jnp.dot(a_ref[...], hs_blk, preferred_element_type=jnp.float32)

    @pl.when(k == pl.num_programs(1) - 1)
    def _():
        o_ref[...] = o_ref[...] * nd_ref[...]


# ---------------------------------------------------------------------------
# Graph prep (hoisted; reuse across stacked LightGCN layers)
# ---------------------------------------------------------------------------
class LightGCNGraph(NamedTuple):
    adj_p: jax.Array     # (n_dst, n_src) bf16 0/1 adjacency, zero-padded
    norm_src: jax.Array  # (N,)  f32  1/sqrt(out_deg(u))
    nd_p: jax.Array      # (n_dst, 1) f32 1/sqrt(in_deg(v)), padded with 1.0
    n: int               # true node count N
    tm: int              # dst tile size
    tk: int              # src tile size


def _tile_sizes(N, tm, tk):
    tm = min(tm, _round_up(N, _SUBLANE))
    tk = min(tk, _round_up(N, _LANE))
    # v7x has 2 TensorCores and the dst axis is "parallel": prefer an even
    # dst-tile count so both cores stay busy (harmless on 1-TC v5e/v6e since
    # tiles stay large enough to amortize per-step overhead).
    n_tiles = _cdiv(N, tm)
    if n_tiles % 2 == 1:
        tm_even = _round_up(_cdiv(N, n_tiles + 1), _SUBLANE)
        if tm_even >= _SUBLANE and _cdiv(N, tm_even) % 2 == 0:
            tm = tm_even
    n_dst = _round_up(N, tm)
    n_src = _round_up(N, tk)
    return tm, tk, n_dst, n_src


def _hs_fits_vmem(n_src, dp, tm, tk):
    # Conservative budget: assume hs is double-buffered even though its block
    # index never changes, plus double-buffered A tiles and the output tile.
    hs_bytes = 2 * n_src * dp * 2
    a_bytes = 2 * tm * tk * 2
    o_bytes = 2 * tm * dp * 4
    return hs_bytes + a_bytes + o_bytes <= (3 * _VMEM_LIMIT_BYTES) // 4


def prepare_lightgcn_graph(adj, *, tm=1024, tk=2048):
    """One-time O(N^2) graph prep: degrees, norms, bf16 cast, padding.

    LightGCN stacks K layers over the same graph -- call this once and reuse
    the result for every propagation step; per-layer cost is then essentially
    just the kernel itself.
    """
    N = adj.shape[0]
    assert adj.shape == (N, N)
    adj = adj.astype(jnp.float32)

    deg_src = jnp.clip(jnp.sum(adj, axis=0), 1.0, None)    # out_degree(u)
    deg_dst = jnp.clip(jnp.sum(adj, axis=1), 1.0, None)    # in_degree(v)
    norm_src = lax.rsqrt(deg_src)                          # (N,)
    norm_dst = lax.rsqrt(deg_dst)[:, None]                 # (N, 1)

    tm, tk, n_dst, n_src = _tile_sizes(N, tm, tk)

    adj_p = (
        jnp.zeros((n_dst, n_src), jnp.bfloat16)
        .at[:N, :N].set(adj.astype(jnp.bfloat16))          # 0/1 exact in bf16
    )
    nd_p = jnp.ones((n_dst, 1), jnp.float32).at[:N].set(norm_dst)

    return LightGCNGraph(adj_p=adj_p, norm_src=norm_src, nd_p=nd_p,
                         n=N, tm=tm, tk=tk)


# ---------------------------------------------------------------------------
# Layer
# ---------------------------------------------------------------------------
def lightgcn_layer_prepared(graph: LightGCNGraph, h):
    """One LightGCN propagation step using a prepared graph."""
    N, D = h.shape
    assert N == graph.n
    n_dst, n_src = graph.adj_p.shape
    tm, tk = graph.tm, graph.tk
    Dp = _round_up(D, _LANE)   # lane-dense output

    # Per-layer prep: scale features by the src norm and pad.
    h_scaled = (h.astype(jnp.float32) * graph.norm_src[:, None]).astype(jnp.bfloat16)
    hs_p = jnp.zeros((n_src, Dp), jnp.bfloat16).at[:N, :D].set(h_scaled)

    grid = (n_dst // tm, n_src // tk)

    if _hs_fits_vmem(n_src, Dp, tm, tk):
        # Whole scaled feature matrix resident in VMEM, DMA'd exactly once.
        kernel = functools.partial(_lightgcn_kernel_resident_hs, tk=tk)
        hs_spec = pl.BlockSpec((n_src, Dp), lambda i, k: (0, 0))
    else:
        kernel = _lightgcn_kernel
        hs_spec = pl.BlockSpec((tk, Dp), lambda i, k: (k, 0))

    out = pl.pallas_call(
        kernel,
        # Output is f32 so it can double as the in-place accumulator (no
        # separate VMEM scratch).  For f32 embeddings (the common case here)
        # this is already h.dtype, so no extra writeback/cast pass.
        out_shape=jax.ShapeDtypeStruct((n_dst, Dp), jnp.float32),
        grid_spec=pltpu.PrefetchScalarGridSpec(
            num_scalar_prefetch=0,
            grid=grid,
            in_specs=[
                pl.BlockSpec((tm, tk), lambda i, k: (i, k)),   # adjacency tile
                hs_spec,                                       # scaled features
                pl.BlockSpec((tm, 1), lambda i, k: (i, 0)),    # dst norm
            ],
            out_specs=pl.BlockSpec((tm, Dp), lambda i, k: (i, 0)),
        ),
        compiler_params=pltpu.CompilerParams(
            # dst axis parallel (megacore / v7x 2-TC sharding); src axis is the
            # sequential reduction and must stay "arbitrary".
            dimension_semantics=("parallel", "arbitrary"),
            vmem_limit_bytes=_VMEM_LIMIT_BYTES,
        ),
    )(graph.adj_p, hs_p, graph.nd_p)

    return out[:N, :D].astype(h.dtype)


def lightgcn_layer(adj, h, *, tm=1024, tk=2048):
    """One-shot convenience wrapper (prep + one propagation step).

    For stacked layers, call prepare_lightgcn_graph() once and reuse it with
    lightgcn_layer_prepared().
    """
    return lightgcn_layer_prepared(prepare_lightgcn_graph(adj, tm=tm, tk=tk), h)


def lightgcn_reference(adj, h):
    """Pure-JAX f32 reference for correctness checking."""
    adj = adj.astype(jnp.float32)
    deg_src = jnp.clip(jnp.sum(adj, axis=0), 1.0, None)
    deg_dst = jnp.clip(jnp.sum(adj, axis=1), 1.0, None)
    w = adj * lax.rsqrt(deg_src)[None, :] * lax.rsqrt(deg_dst)[:, None]
    return w @ h


if __name__ == "__main__":
    key = jax.random.PRNGKey(0)
    k_adj, k_h = jax.random.split(key)

    N = 64   # total number of nodes (users + items)
    D = 32   # embedding dim

    # Deterministic synthetic graph as a dense adjacency matrix.
    adj = jax.random.bernoulli(k_adj, p=0.1, shape=(N, N)).astype(jnp.float32)
    # LightGCNLayer has no learnable parameters; h is the input embedding table.
    h = jax.random.normal(k_h, (N, D), dtype=jnp.float32)

    # Hoisted O(N^2) prep (reusable across stacked layers), then one layer.
    graph = prepare_lightgcn_graph(adj)
    out = jax.block_until_ready(lightgcn_layer_prepared(graph, h))
    ref = lightgcn_reference(adj, h)

    assert out.shape == (N, D)
    # bf16 adjacency/features -> slightly looser tolerance; accumulation is f32.
    assert jnp.allclose(out, ref, atol=2e-2, rtol=2e-2), float(
        jnp.max(jnp.abs(out - ref))
    )

    print("KERNEL_OK")
</pallas_src>

<mosaic_0001>
module attributes {stable_mosaic.version = 11 : i64} {
  func.func @_lightgcn_kernel_resident_hs(%arg0: i32, %arg1: i32, %arg2: memref<32x128xbf16, #tpu.memory_space<vmem>>, %arg3: memref<128x128xbf16, #tpu.memory_space<vmem>>, %arg4: memref<32x1xf32, #tpu.memory_space<vmem>>, %arg5: memref<32x128xf32, #tpu.memory_space<vmem>>) attributes {dimension_semantics = [#tpu.dimension_semantics<parallel>, #tpu.dimension_semantics<arbitrary>], iteration_bounds = array<i64: 2, 1>, scalar_prefetch = 0 : i64, scratch_operands = 0 : i64, tpu.core_type = #tpu.core_type<tc>, window_params = [{transform_indices = @transform_0, window_bounds = array<i64: 32, 128>}, {pipeline_mode = #tpu.pipeline_mode<synchronous>, transform_indices = @transform_1, window_bounds = array<i64: 128, 128>}, {transform_indices = @transform_2, window_bounds = array<i64: 32, 1>}, {transform_indices = @transform_3, window_bounds = array<i64: 32, 128>}]} {
    %c0_i32 = arith.constant 0 : i32
    %0 = arith.cmpi eq, %arg1, %c0_i32 : i32
    %1 = arith.extui %0 : i1 to i32
    %c0_i32_0 = arith.constant 0 : i32
    %2 = arith.cmpi ne, %1, %c0_i32_0 : i32
    scf.if %2 {
      %cst_9 = arith.constant 0.000000e+00 : f32
      %15 = vector.broadcast %cst_9 : f32 to vector<32x128xf32>
      %c0_10 = arith.constant 0 : index
      %c0_11 = arith.constant 0 : index
      %16 = vector.load %arg5[%c0_10, %c0_11] : memref<32x128xf32, #tpu.memory_space<vmem>>, vector<32x128xf32>
      tpu.vector_store %arg5[%c0_10, %c0_11], %15 {strides = array<i32>} : memref<32x128xf32, #tpu.memory_space<vmem>>, vector<32x128xf32>,
    } else {
    }
    %c128_i32 = arith.constant 128 : i32
    %3 = arith.muli %arg1, %c128_i32 : i32
    %4 = tpu.assume_multiple %3, 128 : i32
    %5 = arith.index_cast %4 : i32 to index
    %c0 = arith.constant 0 : index
    %6 = vector.load %arg3[%5, %c0] : memref<128x128xbf16, #tpu.memory_space<vmem>>, vector<128x128xbf16>
    %c0_1 = arith.constant 0 : index
    %c0_2 = arith.constant 0 : index
    %7 = vector.load %arg5[%c0_1, %c0_2] : memref<32x128xf32, #tpu.memory_space<vmem>>, vector<32x128xf32>
    %c0_3 = arith.constant 0 : index
    %c0_4 = arith.constant 0 : index
    %8 = vector.load %arg2[%c0_3, %c0_4] : memref<32x128xbf16, #tpu.memory_space<vmem>>, vector<32x128xbf16>
    %cst = arith.constant dense<0.000000e+00> : vector<32x128xf32>
    %9 = tpu.matmul %8, %6, %cst {dimension_numbers = #tpu.dot_dimension_numbers<[1], [0], [0], [1], [0, 0, 1, 1], [], []>} : vector<32x128xbf16>, vector<128x128xbf16>, vector<32x128xf32> -> vector<32x128xf32>
    %10 = arith.addf %7, %9 : vector<32x128xf32>
    %c0_5 = arith.constant 0 : index
    %c0_6 = arith.constant 0 : index
    %11 = vector.load %arg5[%c0_5, %c0_6] : memref<32x128xf32, #tpu.memory_space<vmem>>, vector<32x128xf32>
    tpu.vector_store %arg5[%c0_5, %c0_6], %10 {strides = array<i32>} : memref<32x128xf32, #tpu.memory_space<vmem>>, vector<32x128xf32>,
    %c0_i32_7 = arith.constant 0 : i32
    %12 = arith.cmpi eq, %arg1, %c0_i32_7 : i32
    %13 = arith.extui %12 : i1 to i32
    %c0_i32_8 = arith.constant 0 : i32
    %14 = arith.cmpi ne, %13, %c0_i32_8 : i32
    scf.if %14 {
      %c0_9 = arith.constant 0 : index
      %c0_10 = arith.constant 0 : index
      %15 = vector.load %arg5[%c0_9, %c0_10] : memref<32x128xf32, #tpu.memory_space<vmem>>, vector<32x128xf32>
      %c0_11 = arith.constant 0 : index
      %c0_12 = arith.constant 0 : index
      %16 = vector.load %arg4[%c0_11, %c0_12] : memref<32x1xf32, #tpu.memory_space<vmem>>, vector<32x1xf32>
      %17 = vector.broadcast %16 : vector<32x1xf32> to vector<32x128xf32>
      %18 = arith.mulf %15, %17 : vector<32x128xf32>
      %c0_13 = arith.constant 0 : index
      %c0_14 = arith.constant 0 : index
      %19 = vector.load %arg5[%c0_13, %c0_14] : memref<32x128xf32, #tpu.memory_space<vmem>>, vector<32x128xf32>
      tpu.vector_store %arg5[%c0_13, %c0_14], %18 {strides = array<i32>} : memref<32x128xf32, #tpu.memory_space<vmem>>, vector<32x128xf32>,
    } else {
    }
    return
  }
  func.func @transform_0(%arg0: i32, %arg1: i32) -> (i32, i32) {
    %c0_i32 = arith.constant 0 : i32
    return %arg0, %arg1 : i32, i32
  }
  func.func @transform_1(%arg0: i32, %arg1: i32) -> (i32, i32) {
    %c0_i32 = arith.constant 0 : i32
    %c0_i32_0 = arith.constant 0 : i32
    %c0_i32_1 = arith.constant 0 : i32
    return %c0_i32, %c0_i32_0 : i32, i32
  }
  func.func @transform_2(%arg0: i32, %arg1: i32) -> (i32, i32) {
    %c0_i32 = arith.constant 0 : i32
    %c0_i32_0 = arith.constant 0 : i32
    return %arg0, %c0_i32 : i32, i32
  }
  func.func @transform_3(%arg0: i32, %arg1: i32) -> (i32, i32) {
    %c0_i32 = arith.constant 0 : i32
    %c0_i32_0 = arith.constant 0 : i32
    return %arg0, %c0_i32 : i32, i32
  }
}

</mosaic_0001>

<llo_original>
// kernel: tpu_custom_call.1
$region0: #{tpu_custom_call.1}
  #allocation0 [shape = 'u32[]', space=smem, size = 0x4, offset = 0x4, fixed_abs, tag = 'smem constant byte address 0x4 - core index']
  #allocation1 [shape = 'u32[144,128]{1,0:T(1,128)}', space=vmem, size = 0x12000, scoped, tag = 'internal scratch']
  %s0 = inlined_call_operand.hbm [shape: bf16[64,128], index: 0, kind: input, shape index: {}]
  %s1 = inlined_call_operand.vmem [shape: bf16[128,128], index: 1, kind: input, shape index: {}]
  %s2 = inlined_call_operand.vmem [shape: f32[64,1], index: 2, kind: input, shape index: {}]
  %s3 = inlined_call_operand.hbm [shape: f32[64,128], index: 3, kind: output, shape index: {}]
  %s4 = sld [smem:[#allocation0]]
  $region57: #{tpu_custom_call.1} parent=0
    _
  %s6 = ssub.s32 1, %s4
  %s7 = scalar_select 0, %s6, %s4
  $region1: #{tpu_custom_call.1} parent=0
    #allocation2 [shape = 'u8[16384]{0}', space=vmem, size = 0x4000, scoped, tag = 'input window, operand 0']
    #allocation3 [shape = 's32[2]{0}', space=sflag, size = 0x8, scoped, tag = 'scoped memory for tpu_custom_call.1']
    #allocation4 [shape = 's32[2]{0}', space=sflag, size = 0x8, scoped, tag = 'scoped memory for tpu_custom_call.1']
    #allocation5 [shape = 'u8[32768]{0}', space=vmem, size = 0x8000, scoped, tag = 'output window, operand 0']
    %8 = vsyncpa [#allocation3], 0
    %s9 = scalar_lea.sflag [#allocation3], 1
    %10 = vsyncpa %s9, 0
    %11 = vsyncpa [#allocation4], 0
    %s12 = scalar_lea.sflag [#allocation4], 1
    %13 = vsyncpa %s12, 0
    loop: start=0, step=1, limit=4
    $region2: #{tpu_custom_call.1} parent=1 // loop_pre_header
      _
    $region3: #{tpu_custom_call.1} parent=1 // loop_header
      %s15 = sphi 0, %s19
      %p16 = scmp.ge.s32.totalorder %s15, 4
      %s22 = sphi 0, %s34
      %s23 = sphi 0, %s30
      %s24 = sphi 0, %s22
      %s25 = sphi 0, %s23
      %s26 = sphi 0, %s24
      %s27 = sphi 0, %s25
      %s39 = sphi 0, %s41
      %s42 = sphi 0, %s39
      %s43 = sphi 0, %s42
      %s59 = sphi 0, %s43
      %s63 = sphi 0, %s63
      %s65 = sphi 0, %s63
      %s66 = sphi 0, %s65
      %s80 = sphi 0, %s66
      %s86 = sphi 0, %s88
      %s89 = sphi 0, %s86
      %s90 = sphi 0, %s89
      %s106 = sphi 0, %s90
      %s112 = sphi 0, %s114
      %s115 = sphi 0, %s112
      %s116 = sphi 0, %s115
      %s132 = sphi 0, %s116
    $region4: #{tpu_custom_call.1} parent=1 // loop_header_branch
      %18 = sbr.rel (%p16) target = $region8
    $region5: #{tpu_custom_call.1} parent=1 // loop_body
      %s20 = ssub.s32 %s15, 1
      %s21 = ssub.s32 %s15, 2
      %s28 = sadd.s32 1, %s23
      %p29 = scmp.ge.s32.totalorder %s28, 1
      %s30 = scalar_select %p29, 0, %s28
      %s31 = sadd.s32 1, %s22
      %s32 = scalar_select %p29, %s31, %s22
      %p33 = scmp.ge.s32.totalorder %s32, 2
      %s34 = scalar_select %p33, 0, %s32
      %s35 = ssub.s32 %s22, %s34
      %s36 = ssub.s32 %s23, %s30
      %s37 = sor.u32 %s35, %s36
      %p38 = scmp.eq.s32.totalorder %s37, 0
      %s40 = sadd.s32 %s39, 1
      %s41 = scalar_select %p38, %s39, %s40
      %p44 = pneg %p38
      %p45 = scmp.eq.s32.totalorder %s15, 1
      %p46 = por %p44, %p45
      %p47 = scmp.ne.s32.totalorder %s39, %s42
      %p48 = scmp.eq.s32.totalorder %s15, 0
      %p49 = por %p47, %p48
      %p50 = scmp.ne.s32.totalorder %s39, %s42
      %p51 = scmp.eq.s32.totalorder %s20, 1
      %p52 = por %p50, %p51
      %p53 = scmp.ne.s32.totalorder %s42, %s43
      %p54 = scmp.eq.s32.totalorder %s20, 0
      %p55 = por %p53, %p54
      %p56 = scmp.ne.s32.totalorder %s42, %s43
      %p57 = scmp.eq.s32.totalorder %s21, 1
      %p58 = por %p56, %p57
      %p60 = scmp.ne.s32.totalorder %s43, %s59
      %p61 = scmp.eq.s32.totalorder %s21, 0
      %p62 = por %p60, %p61
      %s64 = sadd.s32 %s63, 1
      %p67 = scmp.eq.s32.totalorder %s15, 1
      %p68 = scmp.ne.s32.totalorder %s63, %s65
      %p69 = scmp.eq.s32.totalorder %s15, 0
      %p70 = por %p68, %p69
      %p71 = scmp.ne.s32.totalorder %s63, %s65
      %p72 = scmp.eq.s32.totalorder %s20, 1
      %p73 = por %p71, %p72
      %p74 = scmp.ne.s32.totalorder %s65, %s66
      %p75 = scmp.eq.s32.totalorder %s20, 0
      %p76 = por %p74, %p75
      %p77 = scmp.ne.s32.totalorder %s65, %s66
      %p78 = scmp.eq.s32.totalorder %s21, 1
      %p79 = por %p77, %p78
      %p81 = scmp.ne.s32.totalorder %s66, %s80
      %p82 = scmp.eq.s32.totalorder %s21, 0
      %p83 = por %p81, %p82
      %s84 = ssub.s32 %s22, %s34
      %p85 = scmp.eq.s32.totalorder %s84, 0
      %s87 = sadd.s32 %s86, 1
      %s88 = scalar_select %p85, %s86, %s87
      %p91 = pneg %p85
      %p92 = scmp.eq.s32.totalorder %s15, 1
      %p93 = por %p91, %p92
      %p94 = scmp.ne.s32.totalorder %s86, %s89
      %p95 = scmp.eq.s32.totalorder %s15, 0
      %p96 = por %p94, %p95
      %p97 = scmp.ne.s32.totalorder %s86, %s89
      %p98 = scmp.eq.s32.totalorder %s20, 1
      %p99 = por %p97, %p98
      %p100 = scmp.ne.s32.totalorder %s89, %s90
      %p101 = scmp.eq.s32.totalorder %s20, 0
      %p102 = por %p100, %p101
      %p103 = scmp.ne.s32.totalorder %s89, %s90
      %p104 = scmp.eq.s32.totalorder %s21, 1
      %p105 = por %p103, %p104
      %p107 = scmp.ne.s32.totalorder %s90, %s106
      %p108 = scmp.eq.s32.totalorder %s21, 0
      %p109 = por %p107, %p108
      %s110 = ssub.s32 %s22, %s34
      %p111 = scmp.eq.s32.totalorder %s110, 0
      %s113 = sadd.s32 %s112, 1
      %s114 = scalar_select %p111, %s112, %s113
      %p117 = pneg %p111
      %p118 = scmp.eq.s32.totalorder %s15, 1
      %p119 = por %p117, %p118
      %p120 = scmp.ne.s32.totalorder %s112, %s115
      %p121 = scmp.eq.s32.totalorder %s15, 0
      %p122 = por %p120, %p121
      %p123 = scmp.ne.s32.totalorder %s112, %s115
      %p124 = scmp.eq.s32.totalorder %s20, 1
      %p125 = por %p123, %p124
      %p126 = scmp.ne.s32.totalorder %s115, %s116
      %p127 = scmp.eq.s32.totalorder %s20, 0
      %p128 = por %p126, %p127
      %p129 = scmp.ne.s32.totalorder %s115, %s116
      %p130 = scmp.eq.s32.totalorder %s21, 1
      %p131 = por %p129, %p130
      %p133 = scmp.ne.s32.totalorder %s116, %s132
      %p134 = scmp.eq.s32.totalorder %s21, 0
      %p135 = por %p133, %p134
      %p136 = scmp.le.s32.totalorder 1, %s15
      %p137 = scmp.lt.s32.totalorder %s15, 3
      %p138 = pnand %p136, %p137
      %p139 = pneg %p138
      // Predicated region
      $region9: #{tpu_custom_call.1} parent=5 // pred_check
        _
      $region10: #{tpu_custom_call.1} parent=5 // pred_check_branch
        %141 = sbr.rel (%p138) target = $region12
      $region11: #{tpu_custom_call.1} parent=5 // pred_region
        %s142 = ssub.s32 %s15, 1
        // Predicated region
        $region13: #{tpu_custom_call.1} parent=11 // pred_check
          %p143 = pneg %p76
        $region14: #{tpu_custom_call.1} parent=11 // pred_check_branch
          %145 = sbr.rel (%p143) target = $region16
        $region15: #{tpu_custom_call.1} parent=11 // pred_region
          _
        $region16: #{tpu_custom_call.1} parent=11 // pred_fallthru
          _
      $region12: #{tpu_custom_call.1} parent=5 // pred_fallthru
        _
      %p146 = scmp.lt.s32.totalorder %s15, 2
      // Predicated region
      $region17: #{tpu_custom_call.1} parent=5 // pred_check
        %p147 = pneg %p146
      $region18: #{tpu_custom_call.1} parent=5 // pred_check_branch
        %149 = sbr.rel (%p147) target = $region20
      $region19: #{tpu_custom_call.1} parent=5 // pred_region
        // Predicated region
        $region21: #{tpu_custom_call.1} parent=19 // pred_check
          %p150 = pneg %p49
        $region22: #{tpu_custom_call.1} parent=19 // pred_check_branch
          %152 = sbr.rel (%p150) target = $region24
        $region23: #{tpu_custom_call.1} parent=19 // pred_region
          %s153 = sand.u32 %s39, 1
          %s154 = scalar_lea.sflag [#allocation3], %s153
          %s155 = sand.u32 %s39, 1
          %s156 = smul.addr %s155, 16
          %s157 = scalar_lea.vmem [#allocation2], %s156
          %s158 = smul.u32 4, %s22
          %s160 = ssub.s32 256, 256
          %161 = vsyncadd %s154, %s160
          %s162 = sadd.s32 %s23, %s158
          %s163 = smul.addr %s162, 64
          %s164 = scalar_lea.hbm %s0, %s163
          %s165 = sshll.u32 %s157, 4
          %s166 = int_to_ptr.vmem [resolvable:$true] %s165
          %171 = dma.hbm_to_vmem [thread:$0]  %s164, 256, %s166, %s154, 64, 64, 4
        $region24: #{tpu_custom_call.1} parent=19 // pred_fallthru
          _
        // Predicated region
        $region25: #{tpu_custom_call.1} parent=19 // pred_check
          %p172 = pneg %p96
        $region26: #{tpu_custom_call.1} parent=19 // pred_check_branch
          %174 = sbr.rel (%p172) target = $region28
        $region27: #{tpu_custom_call.1} parent=19 // pred_region
          %s175 = smul.u32 4, %s22
          %p176 = scmp.lt.s32.totalorder %s175, 7
          %s177 = scalar_select %p176, %s175, 7
          %s178 = smul.addr %s177, 8
          %s179 = scalar_lea.vmem %s2, %s178
          %s180 = smul.u32 4, %s22
        $region28: #{tpu_custom_call.1} parent=19 // pred_fallthru
          _
      $region20: #{tpu_custom_call.1} parent=5 // pred_fallthru
        _
      %p181 = scmp.le.s32.totalorder 1, %s15
      %p182 = scmp.lt.s32.totalorder %s15, 3
      %p183 = pnand %p181, %p182
      %p184 = pneg %p183
      // Predicated region
      $region29: #{tpu_custom_call.1} parent=5 // pred_check
        _
      $region30: #{tpu_custom_call.1} parent=5 // pred_check_branch
        %186 = sbr.rel (%p183) target = $region32
      $region31: #{tpu_custom_call.1} parent=5 // pred_region
        %s187 = ssub.s32 %s15, 1
        %s188 = sand.u32 %s42, 1
        %s189 = scalar_lea.sflag [#allocation3], %s188
        %s190 = sand.u32 %s42, 1
        %s191 = smul.addr %s190, 16
        %s192 = scalar_lea.vmem [#allocation2], %s191
        // Predicated region
        $region33: #{tpu_custom_call.1} parent=31 // pred_check
          %p193 = pneg %p55
        $region34: #{tpu_custom_call.1} parent=31 // pred_check_branch
          %195 = sbr.rel (%p193) target = $region36
        $region35: #{tpu_custom_call.1} parent=31 // pred_region
          %196 = dma.done %s189, 256
        $region36: #{tpu_custom_call.1} parent=31 // pred_fallthru
          _
        %s197 = sand.u32 %s42, 1
        %s198 = scalar_lea.sflag [#allocation3], %s197
        %s199 = sand.u32 %s42, 1
        %s200 = smul.addr %s199, 16
        %s201 = scalar_lea.vmem [#allocation2], %s200
        %p202 = pneg %p55
        %p203 = pneg %p52
        %p204 = pneg %p76
        %p205 = pneg %p73
        %s206 = smul.u32 4, %s24
        %p207 = scmp.lt.s32.totalorder %s206, 7
        %s208 = scalar_select %p207, %s206, 7
        %s209 = smul.addr %s208, 8
        %s210 = scalar_lea.vmem %s2, %s209
        %p211 = pneg %p102
        %p212 = pneg %p99
        %p213 = pneg %p128
        %p214 = pneg %p125
        %s215 = sand.u32 %s115, 1
        %s216 = scalar_lea.sflag [#allocation4], %s215
        %s217 = sand.u32 %s115, 1
        %s218 = smul.addr %s217, 32
        %s219 = scalar_lea.vmem [#allocation5], %s218
        %s220 = smul.u32 4, %s24
        %s221 = smul.u32 4, %s24
        %p222 = scmp.lt.s32.totalorder %s221, 7
        %s223 = scalar_select %p222, %s221, 7
        %s224 = smul.addr %s223, 8
        %s225 = scalar_lea.vmem %s2, %s224
        %s226 = smul.u32 4, %s24
        %s227 = smul.u32 4, %s24
        %p229 = scmp.eq.s32.totalorder %s25, 0
        // Predicated region
        $region37: #{tpu_custom_call.1} parent=31 // pred_check
          %p230 = pneg %p229
        $region38: #{tpu_custom_call.1} parent=31 // pred_check_branch
          %232 = sbr.rel (%p230) target = $region40
        $region39: #{tpu_custom_call.1} parent=31 // pred_region
          %233 = vst [vmem:[%s219] sm:$0xff] 0.0
          %234 = vst [vmem:[%s219 + $0x8] sm:$0xff] 0.0
          %235 = vst [vmem:[%s219 + $0x10] sm:$0xff] 0.0
          %236 = vst [vmem:[%s219 + $0x18] sm:$0xff] 0.0
        $region40: #{tpu_custom_call.1} parent=31 // pred_fallthru
          _
        %s237 = smul.u32 %s25, 128
        %s238 = sshra.s32 %s237, 3
        %s239 = sand.u32 %s237, 7
        %s240 = smul.addr %s238, 4
        %s241 = scalar_lea.vmem %s1, %s240
        %v242 = vld [vmem:[%s241] sm:$0xf]
        %v243 = vld [vmem:[%s241 + $0x4] sm:$0xf]
        %v244 = vld [vmem:[%s241 + $0x8] sm:$0xf]
        %v245 = vld [vmem:[%s241 + $0xc] sm:$0xf]
        %v246 = vld [vmem:[%s241 + $0x10] sm:$0xf]
        %v247 = vld [vmem:[%s241 + $0x14] sm:$0xf]
        %v248 = vld [vmem:[%s241 + $0x18] sm:$0xf]
        %v249 = vld [vmem:[%s241 + $0x1c] sm:$0xf]
        %v250 = vld [vmem:[%s241 + $0x20] sm:$0xf]
        %v251 = vld [vmem:[%s241 + $0x24] sm:$0xf]
        %v252 = vld [vmem:[%s241 + $0x28] sm:$0xf]
        %v253 = vld [vmem:[%s241 + $0x2c] sm:$0xf]
        %v254 = vld [vmem:[%s241 + $0x30] sm:$0xf]
        %v255 = vld [vmem:[%s241 + $0x34] sm:$0xf]
        %v256 = vld [vmem:[%s241 + $0x38] sm:$0xf]
        %v257 = vld [vmem:[%s241 + $0x3c] sm:$0xf]
        %v258 = vld [vmem:[%s219] sm:$0xff]
        %v259 = vld [vmem:[%s219 + $0x8] sm:$0xff]
        %v260 = vld [vmem:[%s219 + $0x10] sm:$0xff]
        %v261 = vld [vmem:[%s219 + $0x18] sm:$0xff]
        %v262 = vld [vmem:[%s192] sm:$0xf]
        %v263 = vld [vmem:[%s192 + $0x4] sm:$0xf]
        %v264 = vld [vmem:[%s192 + $0x8] sm:$0xf]
        %v265 = vld [vmem:[%s192 + $0xc] sm:$0xf]
        %v270 = vunpack.c.l.b16 %v262
        %v271 = vunpack.c.l.b16 %v263
        %v272 = vunpack.c.l.b16 %v264
        %v273 = vunpack.c.l.b16 %v265
        %v274 = vpack.c.b16 %v271, %v270
        %v275 = vpack.c.b16 %v273, %v272
        %v294 = vunpack.c.l.b16 %v242
        %v295 = vunpack.c.l.b16 %v243
        %v296 = vunpack.c.l.b16 %v244
        %v297 = vunpack.c.l.b16 %v245
        %v298 = vunpack.c.l.b16 %v246
        %v299 = vunpack.c.l.b16 %v247
        %v300 = vunpack.c.l.b16 %v248
        %v301 = vunpack.c.l.b16 %v249
        %v302 = vunpack.c.l.b16 %v250
        %v303 = vunpack.c.l.b16 %v251
        %v304 = vunpack.c.l.b16 %v252
        %v305 = vunpack.c.l.b16 %v253
        %v306 = vunpack.c.l.b16 %v254
        %v307 = vunpack.c.l.b16 %v255
        %v308 = vunpack.c.l.b16 %v256
        %v309 = vunpack.c.l.b16 %v257
        %v310 = vpack.c.b16 %v295, %v294
        %v311 = vpack.c.b16 %v297, %v296
        %v312 = vpack.c.b16 %v299, %v298
        %v313 = vpack.c.b16 %v301, %v300
        %v314 = vpack.c.b16 %v303, %v302
        %v315 = vpack.c.b16 %v305, %v304
        %v316 = vpack.c.b16 %v307, %v306
        %v317 = vpack.c.b16 %v309, %v308
        %326 = vmatprep.subr.bf16.mxu0 0
        %327 = vmatpush1.bf16.msra.mxu0 %v310
        %328 = vmatprep.subr.bf16.mxu0 0
        %329 = vmatpush1.bf16.msra.mxu0 %v311
        %330 = vmatprep.subr.bf16.mxu0 0
        %331 = vmatpush1.bf16.msra.mxu0 %v312
        %332 = vmatprep.subr.bf16.mxu0 0
        %333 = vmatpush1.bf16.msra.mxu0 %v313
        %334 = vmatprep.subr.bf16.mxu0 0
        %335 = vmatpush1.bf16.msra.mxu0 %v314
        %336 = vmatprep.subr.bf16.mxu0 0
        %337 = vmatpush1.bf16.msra.mxu0 %v315
        %338 = vmatprep.subr.bf16.mxu0 0
        %339 = vmatpush1.bf16.msra.mxu0 %v316
        %340 = vmatprep.subr.bf16.mxu0 0
        %341 = vmatpush1.bf16.msra.mxu0 %v317
        %342 = vmatprep.subr.bf16.mxu0 0
        %343 = vmatpush1.bf16.msra.mxu0 0
        %344 = vmatprep.subr.bf16.mxu0 0
        %345 = vmatpush1.bf16.msra.mxu0 0
        %346 = vmatprep.subr.bf16.mxu0 0
        %347 = vmatpush1.bf16.msra.mxu0 0
        %348 = vmatprep.subr.bf16.mxu0 0
        %349 = vmatpush1.bf16.msra.mxu0 0
        %350 = vmatprep.subr.bf16.mxu0 0
        %351 = vmatpush1.bf16.msra.mxu0 0
        %352 = vmatprep.subr.bf16.mxu0 0
        %353 = vmatpush1.bf16.msra.mxu0 0
        %354 = vmatprep.subr.bf16.mxu0 0
        %355 = vmatpush1.bf16.msra.mxu0 0
        %356 = vmatprep.subr.bf16.mxu0 0
        %357 = vmatpush1.bf16.msra.mxu0 0
        %358 = vmatprep.mubr.bf16.mxu0 0
        %359 = vmatmul.mubr.bf16.gmra.mrb[0].mxu0 %v274
        %v360 = vpop.f32.mrb[0].mxu0
        %v361 = vadd.f32 0.0, %v360
        %v362 = vpop.f32.mrb[0].mxu0
        %v363 = vpop.f32.mrb[0].mxu0
        %v364 = vadd.f32 0.0, %v363
        %v365 = vpop.f32.mrb[0].mxu0
        %366 = vmatprep.mubr.bf16.mxu0 0
        %367 = vmatmul.mubr.bf16.gmra.mrb[0].mxu0 %v275
        %v368 = vpop.f32.mrb[0].mxu0
        %v369 = vadd.f32 0.0, %v368
        %v370 = vpop.f32.mrb[0].mxu0
        %v371 = vpop.f32.mrb[0].mxu0
        %v372 = vadd.f32 0.0, %v371
        %v373 = vpop.f32.mrb[0].mxu0
        %374 = vdwg.mxu0
        %v375 = vadd.f32 %v258, %v361
        %v376 = vadd.f32 %v259, %v364
        %v377 = vadd.f32 %v260, %v369
        %v378 = vadd.f32 %v261, %v372
        %379 = vst [vmem:[%s219] sm:$0xff] %v375
        %380 = vst [vmem:[%s219 + $0x8] sm:$0xff] %v376
        %381 = vst [vmem:[%s219 + $0x10] sm:$0xff] %v377
        %382 = vst [vmem:[%s219 + $0x18] sm:$0xff] %v378
        // Predicated region
        $region41: #{tpu_custom_call.1} parent=31 // pred_check
          %p383 = pneg %p229
        $region42: #{tpu_custom_call.1} parent=31 // pred_check_branch
          %385 = sbr.rel (%p383) target = $region44
        $region43: #{tpu_custom_call.1} parent=31 // pred_region
          %v386 = vld [vmem:[%s219] sm:$0xff]
          %v387 = vld [vmem:[%s219 + $0x8] sm:$0xff]
          %v388 = vld [vmem:[%s219 + $0x10] sm:$0xff]
          %v389 = vld [vmem:[%s219 + $0x18] sm:$0xff]
          %v390 = vld [vmem:[%s225] sm:$0xff]
          %v391 = vld [vmem:[%s225 + $0x8] sm:$0xff]
          %v392 = vld [vmem:[%s225 + $0x10] sm:$0xff]
          %v393 = vld [vmem:[%s225 + $0x18] sm:$0xff]
          %395 = vset.pattern.permute.xlu0 0
          %396 = vperm.xlu0 %395, %v390
          %v397 = vpop.permute.xlu0 %396
          %400 = vset.pattern.permute.xlu0 0
          %401 = vperm.xlu0 %400, %v391
          %v402 = vpop.permute.xlu0 %401
          %405 = vset.pattern.permute.xlu0 0
          %406 = vperm.xlu0 %405, %v392
          %v407 = vpop.permute.xlu0 %406
          %410 = vset.pattern.permute.xlu0 0
          %411 = vperm.xlu0 %410, %v393
          %v412 = vpop.permute.xlu0 %411
          %v414 = vmul.f32 %v386, %v397
          %v415 = vmul.f32 %v387, %v402
          %v416 = vmul.f32 %v388, %v407
          %v417 = vmul.f32 %v389, %v412
          %418 = vst [vmem:[%s219] sm:$0xff] %v414
          %419 = vst [vmem:[%s219 + $0x8] sm:$0xff] %v415
          %420 = vst [vmem:[%s219 + $0x10] sm:$0xff] %v416
          %421 = vst [vmem:[%s219 + $0x18] sm:$0xff] %v417
        $region44: #{tpu_custom_call.1} parent=31 // pred_fallthru
          _
        %s422 = sand.u32 %s115, 1
        %s423 = scalar_lea.sflag [#allocation4], %s422
        %s424 = sand.u32 %s115, 1
        %s425 = smul.addr %s424, 32
        %s426 = scalar_lea.vmem [#allocation5], %s425
        // Predicated region
        $region45: #{tpu_custom_call.1} parent=31 // pred_check
          %p427 = pneg %p125
        $region46: #{tpu_custom_call.1} parent=31 // pred_check_branch
          %429 = sbr.rel (%p427) target = $region48
        $region47: #{tpu_custom_call.1} parent=31 // pred_region
          %s430 = smul.u32 4, %s24
          %s432 = ssub.s32 512, 512
          %433 = vsyncadd %s423, %s432
          %s434 = smul.addr %s430, 128
          %s435 = scalar_lea.hbm %s3, %s434
          %s436 = sshll.u32 %s426, 4
          %s437 = int_to_ptr.vmem [resolvable:$true] %s436
          %442 = dma.vmem_to_hbm [thread:$0]  %s437, 512, %s435, %s423, 128, 128, 8
        $region48: #{tpu_custom_call.1} parent=31 // pred_fallthru
          _
      $region32: #{tpu_custom_call.1} parent=5 // pred_fallthru
        _
      %p443 = scmp.le.s32.totalorder 2, %s15
      // Predicated region
      $region49: #{tpu_custom_call.1} parent=5 // pred_check
        %p444 = pneg %p443
      $region50: #{tpu_custom_call.1} parent=5 // pred_check_branch
        %446 = sbr.rel (%p444) target = $region52
      $region51: #{tpu_custom_call.1} parent=5 // pred_region
        %s447 = ssub.s32 %s15, 2
        // Predicated region
        $region53: #{tpu_custom_call.1} parent=51 // pred_check
          %p448 = pneg %p131
        $region54: #{tpu_custom_call.1} parent=51 // pred_check_branch
          %450 = sbr.rel (%p448) target = $region56
        $region55: #{tpu_custom_call.1} parent=51 // pred_region
          %s451 = sand.u32 %s116, 1
          %s452 = scalar_lea.sflag [#allocation4], %s451
          %s453 = sand.u32 %s116, 1
          %s454 = smul.addr %s453, 32
          %s455 = scalar_lea.vmem [#allocation5], %s454
          %456 = dma.done %s452, 512
        $region56: #{tpu_custom_call.1} parent=51 // pred_fallthru
          _
      $region52: #{tpu_custom_call.1} parent=5 // pred_fallthru
        _
    $region6: #{tpu_custom_call.1} parent=1 // loop_footer
      %s19 = sadd.s32 1, %s15
    $region7: #{tpu_custom_call.1} parent=1 // loop_footer_branch
      %14 = sbr.rel target = $region3
    $region8: #{tpu_custom_call.1} parent=1 // loop_exit
      _
    %457 = vsyncpa [#allocation3], 1
    %s458 = scalar_lea.sflag [#allocation3], 1
    %459 = vsyncpa %s458, 1
    %460 = vsyncpa [#allocation4], 1
    %s461 = scalar_lea.sflag [#allocation4], 1
    %462 = vsyncpa %s461, 1

</llo_original>
